<compile_context>
chip_gen: v6e
topology: v6e:2x2x1
jax: 0.10.0
libtpu: 0.0.40
codegen_flags: <defaults>
</compile_context>

<pallas_src>
import functools

import jax
import jax.numpy as jnp
from jax import lax
from jax.experimental import pallas as pl
from jax.experimental.pallas import tpu as pltpu


# ---------------------------------------------------------------------------
# kernel
# ---------------------------------------------------------------------------
def _double_conv_kernel(x_ref, xt_ref, xb_ref, w1_ref, s1_ref, b1_ref,
                        w2_ref, s2_ref, b2_ref, o_ref,
                        *, W, TH, cmid_p, res, accum_taps):
    THW = TH * W
    hi = pl.program_id(1)
    nH = pl.num_programs(1)
    cdt = w1_ref.dtype                     # compute dtype (bf16 or f32)
    cout = w2_ref.shape[0]

    # ---- stage 1 (fused per row tile): conv1x1 + BN(eval) + ReLU on the TH
    #      tile rows plus one halo row above/below.  One MXU matmul.
    x_tile = x_ref[0]                                                # (cin, THW)
    xin = jnp.concatenate([xt_ref[0, 0], x_tile, xb_ref[0, 0]],
                          axis=1).astype(cdt)                        # (cin, THW+2W)
    h = jnp.dot(w1_ref[...], xin, preferred_element_type=jnp.float32)
    h = jnp.maximum(h * s1_ref[...] + b1_ref[...], 0.0).astype(cdt)  # (cmid_p, THW+2W)

    # Out-of-image halo rows must be exactly zero (the SAME padding of the 3x3
    # conv applies to h1, not to x).
    zrow = jnp.zeros((cmid_p, W), cdt)
    h_top = jnp.where(hi > 0, h[:, :W], zrow)
    h_bot = jnp.where(hi < nH - 1, h[:, W + THW:], zrow)
    zcol = jnp.zeros((cmid_p, 1), cdt)
    # slab layout: [left-pad(1) | top halo row(W) | tile(THW) | bottom halo(W) | pad(1)]
    slab = jnp.concatenate([zcol, h_top, h[:, W:W + THW], h_bot, zcol], axis=1)

    # ---- stage 2: 3x3 conv on the row tile as shifted-tap MXU matmul(s).
    col = lax.broadcasted_iota(jnp.int32, (1, THW), 1) % W            # hoisted
    taps = []
    for dy in (-1, 0, 1):
        for dx in (-1, 0, 1):
            shift = W + 1 + dy * W + dx                               # static per tap
            p = slab[:, shift:shift + THW]                            # static shifted slice
            if dx == -1:                                              # width wrap-around mask
                p = jnp.where(col != 0, p, jnp.zeros_like(p))
            elif dx == 1:
                p = jnp.where(col != W - 1, p, jnp.zeros_like(p))
            taps.append(p)

    if accum_taps:
        # v5e-friendly: 9 accumulating (cout,cmid_p)@(cmid_p,THW) matmuls, no
        # materialized im2col concat (saves a (9*cmid_p, THW) VMEM round trip).
        y = jnp.zeros((cout, THW), jnp.float32)
        for t, p in enumerate(taps):
            y = y + jnp.dot(w2_ref[:, t * cmid_p:(t + 1) * cmid_p], p,
                            preferred_element_type=jnp.float32)
    else:
        patches = jnp.concatenate(taps, axis=0)                       # (9*cmid_p, THW)
        y = jnp.dot(w2_ref[...], patches,
                    preferred_element_type=jnp.float32)               # K = 9*cmid_p

    y = jnp.maximum(y * s2_ref[...] + b2_ref[...], 0.0)               # BN + ReLU
    if res:
        y = y + x_ref[0].astype(jnp.float32)                          # residual
    o_ref[0] = y.astype(o_ref.dtype)                                  # lane-dense store


# ---------------------------------------------------------------------------
# wrapper
# ---------------------------------------------------------------------------
def _vmem_caps():
    """(vmem_limit_bytes, working-set budget) derived from this chip's VMEM."""
    cap = 64 * 1024 * 1024                       # conservative fallback (v7x)
    try:
        cap = int(getattr(pltpu.get_tpu_info(), "vmem_capacity_bytes", cap))
    except Exception:
        pass
    limit = min(cap * 3 // 4, 100 * 1024 * 1024)
    return limit, int(limit * 0.8)


def _pick_row_tile(H, W, est, budget, max_rows=None):
    """Largest TH dividing H with lane-aligned THW that fits the VMEM budget."""
    divs = [d for d in range(1, H + 1) if H % d == 0]
    if max_rows is not None:
        divs = [d for d in divs if d <= max_rows] or [min(divs)]
    aligned = [d for d in divs if (d * W) % 128 == 0]
    cands = aligned or divs                      # unaligned fallback -> masked stores
    fit = [d for d in cands if est(d) <= budget]
    return max(fit) if fit else min(cands)


def double_conv(x_nchw, kparams, *, res=True, max_tile_rows=None, accum_taps=None):
    """x_nchw: (N, Cin, H, W).  kparams: kernel-layout params (prep_kernel_params)."""
    w1, s1, b1, w2, s2, b2 = kparams
    N, cin, H, W = x_nchw.shape
    cmid_p = w1.shape[0]
    cout = w2.shape[0]
    res = bool(res) and (cin == cout)
    cdt_b = w1.dtype.itemsize
    x_b = x_nchw.dtype.itemsize

    limit, budget = _vmem_caps()

    def est(th):                                  # per-step VMEM estimate (bytes)
        thw = th * W
        b = 2 * cin * thw * x_b                   # x tile (double buffered)
        b += 2 * cout * thw * x_b                 # out tile (double buffered)
        b += 4 * cin * W * x_b                    # halo row blocks
        b += cin * (thw + 2 * W) * cdt_b          # xin
        b += cmid_p * (thw + 2 * W) * (4 + cdt_b)  # h1 (f32 acc + cast)
        b += cmid_p * (thw + 2 * W + 2) * cdt_b   # padded slab
        b += 2 * 9 * cmid_p * thw * cdt_b         # taps + im2col concat
        b += cout * thw * 4                       # f32 accumulator
        b += 2 * (cmid_p * cin + 9 * cmid_p * cout) * cdt_b
        return b + (2 << 20)                      # margin

    TH = _pick_row_tile(H, W, est, budget, max_tile_rows)
    nH = H // TH
    HW, THW = H * W, TH * W

    if accum_taps is None:
        accum_taps = cmid_p >= 128                # K per tap already fills the MXU

    x_flat = x_nchw.reshape(N, cin, HW)           # free reshape; NCHW stays contiguous

    # Halo rows gathered once in the wrapper (tiny: 2*N*nH*cin*W elements).
    zrow = jnp.zeros((N, cin, 1, W), x_nchw.dtype)
    prev_last = x_nchw[:, :, TH - 1::TH, :]       # row (j+1)*TH - 1
    next_first = x_nchw[:, :, ::TH, :]            # row j*TH
    x_top = jnp.transpose(
        jnp.concatenate([zrow, prev_last[:, :, :nH - 1, :]], axis=2), (0, 2, 1, 3))
    x_bot = jnp.transpose(
        jnp.concatenate([next_first[:, :, 1:, :], zrow], axis=2), (0, 2, 1, 3))

    kernel = functools.partial(_double_conv_kernel, W=W, TH=TH, cmid_p=cmid_p,
                               res=res, accum_taps=accum_taps)

    out_flat = pl.pallas_call(
        kernel,
        out_shape=jax.ShapeDtypeStruct((N, cout, HW), x_nchw.dtype),
        grid_spec=pltpu.PrefetchScalarGridSpec(
            num_scalar_prefetch=0,
            grid=(N, nH),
            in_specs=[
                pl.BlockSpec((1, cin, THW), lambda n, h: (n, 0, h)),     # x row tile
                pl.BlockSpec((1, 1, cin, W), lambda n, h: (n, h, 0, 0)),  # top halo row
                pl.BlockSpec((1, 1, cin, W), lambda n, h: (n, h, 0, 0)),  # bottom halo row
                pl.BlockSpec((cmid_p, cin), lambda n, h: (0, 0)),
                pl.BlockSpec((cmid_p, 1), lambda n, h: (0, 0)),
                pl.BlockSpec((cmid_p, 1), lambda n, h: (0, 0)),
                pl.BlockSpec((cout, 9 * cmid_p), lambda n, h: (0, 0)),
                pl.BlockSpec((cout, 1), lambda n, h: (0, 0)),
                pl.BlockSpec((cout, 1), lambda n, h: (0, 0)),
            ],
            out_specs=pl.BlockSpec((1, cout, THW), lambda n, h: (n, 0, h)),
        ),
        compiler_params=pltpu.CompilerParams(
            dimension_semantics=("parallel", "parallel"),
            vmem_limit_bytes=int(limit)),
    )(x_flat, x_top, x_bot, w1, s1, b1, w2, s2, b2)

    return out_flat.reshape(N, cout, H, W)


# ---------------------------------------------------------------------------
# parameters (PyTorch layout) + kernel-layout prep + plain-JAX reference
# ---------------------------------------------------------------------------
def make_params(key, cin, cout):
    """Deterministic synthetic parameters in PyTorch layout (eval-mode BN)."""
    cmid = cout // 2
    ks = jax.random.split(key, 10)
    w1 = jax.random.normal(ks[0], (cmid, cin, 1, 1), jnp.float32) / jnp.sqrt(cin)
    bn1 = (1.0 + 0.1 * jax.random.normal(ks[1], (cmid,), jnp.float32),
           0.1 * jax.random.normal(ks[2], (cmid,), jnp.float32),
           0.1 * jax.random.normal(ks[3], (cmid,), jnp.float32),
           1.0 + 0.1 * jax.random.uniform(ks[4], (cmid,), jnp.float32))
    w2 = jax.random.normal(ks[5], (cout, cmid, 3, 3), jnp.float32) / jnp.sqrt(9 * cmid)
    bn2 = (1.0 + 0.1 * jax.random.normal(ks[6], (cout,), jnp.float32),
           0.1 * jax.random.normal(ks[7], (cout,), jnp.float32),
           0.1 * jax.random.normal(ks[8], (cout,), jnp.float32),
           1.0 + 0.1 * jax.random.uniform(ks[9], (cout,), jnp.float32))
    return dict(w1=w1, bn1=bn1, w2=w2, bn2=bn2)


def _fold_bn(gamma, beta, mean, var, eps=1e-5):
    s = gamma / jnp.sqrt(var + eps)
    return s, beta - mean * s


def prep_kernel_params(params, compute_dtype=jnp.bfloat16):
    """PyTorch layout -> kernel layout, done ONCE outside the kernel.

    Weights go to `compute_dtype` (bf16 default: MXU-native); BN scale/bias stay
    f32.  cmid is zero-padded to a multiple of 16 (bf16) / 8 (f32) so sublane
    tiling of the 9-tap concat and the K dimension stay aligned.
    """
    cdt = jnp.dtype(compute_dtype)
    align = 16 if cdt == jnp.bfloat16 else 8
    w1 = params["w1"][:, :, 0, 0]                                   # (cmid, cin)
    cmid = w1.shape[0]
    cout = params["w2"].shape[0]
    cmid_p = -(-cmid // align) * align
    pad = cmid_p - cmid
    w1p = jnp.pad(w1, ((0, pad), (0, 0))).astype(cdt)
    s1, b1 = _fold_bn(*params["bn1"])
    s1p = jnp.pad(s1, (0, pad), constant_values=1.0)
    b1p = jnp.pad(b1, (0, pad))                                     # zero bias -> relu(0)=0
    # (cout, cmid, 3, 3) -> (cout, 3, 3, cmid_p) -> (cout, 9*cmid_p): matches the
    # kernel's tap order (dy outer, dx inner, channel fastest); padded channels = 0.
    w2t = jnp.transpose(params["w2"], (0, 2, 3, 1))
    w2t = jnp.pad(w2t, ((0, 0), (0, 0), (0, 0), (0, pad)))
    w2p = w2t.reshape(cout, 9 * cmid_p).astype(cdt)
    s2, b2 = _fold_bn(*params["bn2"])
    return (w1p, s1p[:, None], b1p[:, None], w2p, s2[:, None], b2[:, None])


def reference_double_conv(x_nchw, params, *, res=True):
    """Plain-JAX NCHW reference mirroring the PyTorch module (eval-mode BN)."""
    cin = x_nchw.shape[1]
    cout = params["w2"].shape[0]
    s1, b1 = _fold_bn(*params["bn1"])
    s2, b2 = _fold_bn(*params["bn2"])
    h = lax.conv_general_dilated(x_nchw, params["w1"], (1, 1), "SAME",
                                 dimension_numbers=("NCHW", "OIHW", "NCHW"))
    h = jnp.maximum(h * s1[None, :, None, None] + b1[None, :, None, None], 0.0)
    y = lax.conv_general_dilated(h, params["w2"], (1, 1), "SAME",
                                 dimension_numbers=("NCHW", "OIHW", "NCHW"))
    y = jnp.maximum(y * s2[None, :, None, None] + b2[None, :, None, None], 0.0)
    if res and cin == cout:
        y = y + x_nchw
    return y


# ---------------------------------------------------------------------------
# main
# ---------------------------------------------------------------------------
if __name__ == "__main__":
    key = jax.random.PRNGKey(0)
    kx, kp, kx2, kp2 = jax.random.split(key, 4)

    N, Cin, Cout, H, W = 2, 4, 4, 16, 16
    x = jax.random.normal(kx, (N, Cin, H, W), jnp.float32)
    params = make_params(kp, Cin, Cout)
    ref = reference_double_conv(x, params, res=True)

    # 1) f32 compute, forced row tiling (nH=2) -> tight check of halo/tap logic.
    out = double_conv(x, prep_kernel_params(params, jnp.float32),
                      res=True, max_tile_rows=8)
    out = jax.block_until_ready(out)
    assert out.shape == (N, Cout, H, W)
    assert jnp.allclose(out, ref, atol=1e-4, rtol=1e-4), "f32 tiled mismatch"

    # 2) bf16 MXU compute, auto (largest) row tile.
    out_bf = jax.block_until_ready(
        double_conv(x, prep_kernel_params(params, jnp.bfloat16), res=True))
    assert jnp.allclose(out_bf, ref, atol=5e-2, rtol=5e-2), "bf16 mismatch"

    # 3) cin != cout (residual auto-disabled), bf16, forced tiling.
    x2 = jax.random.normal(kx2, (1, 3, H, W), jnp.float32)
    params2 = make_params(kp2, 3, 8)
    ref2 = reference_double_conv(x2, params2, res=True)
    out2 = jax.block_until_ready(
        double_conv(x2, prep_kernel_params(params2, jnp.bfloat16),
                    res=True, max_tile_rows=8))
    assert out2.shape == ref2.shape
    assert jnp.allclose(out2, ref2, atol=5e-2, rtol=5e-2), "no-res mismatch"

    print("KERNEL_OK")
</pallas_src>

<mosaic_0001>
module attributes {stable_mosaic.version = 11 : i64} {
  func.func @_double_conv_kernel(%arg0: i32, %arg1: i32, %arg2: memref<1x4x128xf32, #tpu.memory_space<vmem>>, %arg3: memref<1x1x4x16xf32, #tpu.memory_space<vmem>>, %arg4: memref<1x1x4x16xf32, #tpu.memory_space<vmem>>, %arg5: memref<8x4xf32, #tpu.memory_space<vmem>>, %arg6: memref<8x1xf32, #tpu.memory_space<vmem>>, %arg7: memref<8x1xf32, #tpu.memory_space<vmem>>, %arg8: memref<4x72xf32, #tpu.memory_space<vmem>>, %arg9: memref<4x1xf32, #tpu.memory_space<vmem>>, %arg10: memref<4x1xf32, #tpu.memory_space<vmem>>, %arg11: memref<1x4x128xf32, #tpu.memory_space<vmem>>) attributes {dimension_semantics = [#tpu.dimension_semantics<parallel>, #tpu.dimension_semantics<parallel>], iteration_bounds = array<i64: 2, 2>, scalar_prefetch = 0 : i64, scratch_operands = 0 : i64, tpu.core_type = #tpu.core_type<tc>, window_params = [{transform_indices = @transform_0, window_bounds = array<i64: 1, 4, 128>}, {transform_indices = @transform_1, window_bounds = array<i64: 1, 1, 4, 16>}, {transform_indices = @transform_2, window_bounds = array<i64: 1, 1, 4, 16>}, {pipeline_mode = #tpu.pipeline_mode<synchronous>, transform_indices = @transform_3, window_bounds = array<i64: 8, 4>}, {pipeline_mode = #tpu.pipeline_mode<synchronous>, transform_indices = @transform_4, window_bounds = array<i64: 8, 1>}, {pipeline_mode = #tpu.pipeline_mode<synchronous>, transform_indices = @transform_5, window_bounds = array<i64: 8, 1>}, {pipeline_mode = #tpu.pipeline_mode<synchronous>, transform_indices = @transform_6, window_bounds = array<i64: 4, 72>}, {pipeline_mode = #tpu.pipeline_mode<synchronous>, transform_indices = @transform_7, window_bounds = array<i64: 4, 1>}, {pipeline_mode = #tpu.pipeline_mode<synchronous>, transform_indices = @transform_8, window_bounds = array<i64: 4, 1>}, {transform_indices = @transform_9, window_bounds = array<i64: 1, 4, 128>}]} {
    %c0 = arith.constant 0 : index
    %c0_0 = arith.constant 0 : index
    %c0_1 = arith.constant 0 : index
    %0 = vector.load %arg2[%c0, %c0_0, %c0_1] : memref<1x4x128xf32, #tpu.memory_space<vmem>>, vector<1x4x128xf32>
    %1 = vector.shape_cast %0 : vector<1x4x128xf32> to vector<4x128xf32>
    %c0_2 = arith.constant 0 : index
    %c0_3 = arith.constant 0 : index
    %c0_4 = arith.constant 0 : index
    %c0_5 = arith.constant 0 : index
    %2 = vector.load %arg3[%c0_2, %c0_3, %c0_4, %c0_5] : memref<1x1x4x16xf32, #tpu.memory_space<vmem>>, vector<1x1x4x16xf32>
    %3 = vector.shape_cast %2 : vector<1x1x4x16xf32> to vector<4x16xf32>
    %c0_6 = arith.constant 0 : index
    %c0_7 = arith.constant 0 : index
    %c0_8 = arith.constant 0 : index
    %c0_9 = arith.constant 0 : index
    %4 = vector.load %arg4[%c0_6, %c0_7, %c0_8, %c0_9] : memref<1x1x4x16xf32, #tpu.memory_space<vmem>>, vector<1x1x4x16xf32>
    %5 = vector.shape_cast %4 : vector<1x1x4x16xf32> to vector<4x16xf32>
    %6 = tpu.concatenate %3, %1, %5 in 1 : vector<4x16xf32>, vector<4x128xf32>, vector<4x16xf32> -> vector<4x160xf32>
    %c0_10 = arith.constant 0 : index
    %c0_11 = arith.constant 0 : index
    %7 = vector.load %arg5[%c0_10, %c0_11] : memref<8x4xf32, #tpu.memory_space<vmem>>, vector<8x4xf32>
    %cst = arith.constant dense<0.000000e+00> : vector<8x160xf32>
    %8 = tpu.matmul %7, %6, %cst {dimension_numbers = #tpu.dot_dimension_numbers<[1], [0], [0], [1], [0, 0, 1, 1], [], []>} : vector<8x4xf32>, vector<4x160xf32>, vector<8x160xf32> -> vector<8x160xf32>
    %c0_12 = arith.constant 0 : index
    %c0_13 = arith.constant 0 : index
    %9 = vector.load %arg6[%c0_12, %c0_13] : memref<8x1xf32, #tpu.memory_space<vmem>>, vector<8x1xf32>
    %10 = vector.broadcast %9 : vector<8x1xf32> to vector<8x160xf32>
    %11 = arith.mulf %8, %10 : vector<8x160xf32>
    %c0_14 = arith.constant 0 : index
    %c0_15 = arith.constant 0 : index
    %12 = vector.load %arg7[%c0_14, %c0_15] : memref<8x1xf32, #tpu.memory_space<vmem>>, vector<8x1xf32>
    %13 = vector.broadcast %12 : vector<8x1xf32> to vector<8x160xf32>
    %14 = arith.addf %11, %13 : vector<8x160xf32>
    %cst_16 = arith.constant 0.000000e+00 : f32
    %15 = vector.broadcast %cst_16 : f32 to vector<8x160xf32>
    %16 = arith.maximumf %14, %15 : vector<8x160xf32>
    %cst_17 = arith.constant 0.000000e+00 : f32
    %17 = vector.broadcast %cst_17 : f32 to vector<8x16xf32>
    %c0_i32 = arith.constant 0 : i32
    %18 = arith.cmpi sgt, %arg1, %c0_i32 : i32
    %19 = vector.extract_strided_slice %16 {offsets = [0, 0], sizes = [8, 16], strides = [1, 1]} : vector<8x160xf32> to vector<8x16xf32>
    %20 = arith.select %18, %19, %17 : vector<8x16xf32>
    %c1_i32 = arith.constant 1 : i32
    %21 = arith.cmpi slt, %arg1, %c1_i32 : i32
    %22 = vector.extract_strided_slice %16 {offsets = [0, 144], sizes = [8, 16], strides = [1, 1]} : vector<8x160xf32> to vector<8x16xf32>
    %23 = arith.select %21, %22, %17 : vector<8x16xf32>
    %cst_18 = arith.constant 0.000000e+00 : f32
    %24 = vector.broadcast %cst_18 : f32 to vector<8x1xf32>
    %25 = vector.extract_strided_slice %16 {offsets = [0, 16], sizes = [8, 128], strides = [1, 1]} : vector<8x160xf32> to vector<8x128xf32>
    %26 = tpu.concatenate %24, %20, %25, %23, %24 in 1 : vector<8x1xf32>, vector<8x16xf32>, vector<8x128xf32>, vector<8x16xf32>, vector<8x1xf32> -> vector<8x162xf32>
    %27 = tpu.iota {dimensions = array<i32: 1>} : vector<1x128xi32>
    %c16_i32 = arith.constant 16 : i32
    %c0_i32_19 = arith.constant 0 : i32
    %28 = arith.cmpi eq, %c16_i32, %c0_i32_19 : i32
    %c1_i32_20 = arith.constant 1 : i32
    %29 = arith.select %28, %c1_i32_20, %c16_i32 : i32
    %30 = vector.broadcast %29 : i32 to vector<1x128xi32>
    %31 = arith.remsi %27, %30 : vector<1x128xi32>
    %c0_i32_21 = arith.constant 0 : i32
    %32 = vector.broadcast %c0_i32_21 : i32 to vector<1x128xi32>
    %33 = arith.cmpi ne, %31, %32 : vector<1x128xi32>
    %c0_i32_22 = arith.constant 0 : i32
    %34 = vector.broadcast %c0_i32_22 : i32 to vector<1x128xi32>
    %35 = arith.cmpi slt, %31, %34 : vector<1x128xi32>
    %c0_i32_23 = arith.constant 0 : i32
    %36 = arith.cmpi slt, %29, %c0_i32_23 : i32
    %37 = vector.broadcast %36 : i1 to vector<1x128xi1>
    %38 = vector.broadcast %37 : vector<1x128xi1> to vector<1x128xi1>
    %39 = arith.xori %35, %38 : vector<1x128xi1>
    %40 = arith.andi %39, %33 : vector<1x128xi1>
    %41 = vector.broadcast %29 : i32 to vector<1x128xi32>
    %42 = arith.addi %31, %41 : vector<1x128xi32>
    %43 = arith.select %40, %42, %31 : vector<1x128xi1>, vector<1x128xi32>
    %44 = vector.extract_strided_slice %26 {offsets = [0, 0], sizes = [8, 128], strides = [1, 1]} : vector<8x162xf32> to vector<8x128xf32>
    %c0_i32_24 = arith.constant 0 : i32
    %45 = vector.broadcast %c0_i32_24 : i32 to vector<1x128xi32>
    %46 = arith.cmpi ne, %43, %45 : vector<1x128xi32>
    %cst_25 = arith.constant 0.000000e+00 : f32
    %47 = vector.broadcast %cst_25 : f32 to vector<8x128xf32>
    %48 = vector.shape_cast %46 : vector<1x128xi1> to vector<1x128xi1>
    %49 = vector.broadcast %48 : vector<1x128xi1> to vector<8x128xi1>
    %50 = arith.select %49, %44, %47 : vector<8x128xi1>, vector<8x128xf32>
    %51 = vector.extract_strided_slice %26 {offsets = [0, 1], sizes = [8, 128], strides = [1, 1]} : vector<8x162xf32> to vector<8x128xf32>
    %52 = vector.extract_strided_slice %26 {offsets = [0, 2], sizes = [8, 128], strides = [1, 1]} : vector<8x162xf32> to vector<8x128xf32>
    %c15_i32 = arith.constant 15 : i32
    %53 = vector.broadcast %c15_i32 : i32 to vector<1x128xi32>
    %54 = arith.cmpi ne, %43, %53 : vector<1x128xi32>
    %cst_26 = arith.constant 0.000000e+00 : f32
    %55 = vector.broadcast %cst_26 : f32 to vector<8x128xf32>
    %56 = vector.shape_cast %54 : vector<1x128xi1> to vector<1x128xi1>
    %57 = vector.broadcast %56 : vector<1x128xi1> to vector<8x128xi1>
    %58 = arith.select %57, %52, %55 : vector<8x128xi1>, vector<8x128xf32>
    %59 = vector.extract_strided_slice %26 {offsets = [0, 16], sizes = [8, 128], strides = [1, 1]} : vector<8x162xf32> to vector<8x128xf32>
    %c0_i32_27 = arith.constant 0 : i32
    %60 = vector.broadcast %c0_i32_27 : i32 to vector<1x128xi32>
    %61 = arith.cmpi ne, %43, %60 : vector<1x128xi32>
    %cst_28 = arith.constant 0.000000e+00 : f32
    %62 = vector.broadcast %cst_28 : f32 to vector<8x128xf32>
    %63 = vector.shape_cast %61 : vector<1x128xi1> to vector<1x128xi1>
    %64 = vector.broadcast %63 : vector<1x128xi1> to vector<8x128xi1>
    %65 = arith.select %64, %59, %62 : vector<8x128xi1>, vector<8x128xf32>
    %66 = vector.extract_strided_slice %26 {offsets = [0, 17], sizes = [8, 128], strides = [1, 1]} : vector<8x162xf32> to vector<8x128xf32>
    %67 = vector.extract_strided_slice %26 {offsets = [0, 18], sizes = [8, 128], strides = [1, 1]} : vector<8x162xf32> to vector<8x128xf32>
    %c15_i32_29 = arith.constant 15 : i32
    %68 = vector.broadcast %c15_i32_29 : i32 to vector<1x128xi32>
    %69 = arith.cmpi ne, %43, %68 : vector<1x128xi32>
    %cst_30 = arith.constant 0.000000e+00 : f32
    %70 = vector.broadcast %cst_30 : f32 to vector<8x128xf32>
    %71 = vector.shape_cast %69 : vector<1x128xi1> to vector<1x128xi1>
    %72 = vector.broadcast %71 : vector<1x128xi1> to vector<8x128xi1>
    %73 = arith.select %72, %67, %70 : vector<8x128xi1>, vector<8x128xf32>
    %74 = vector.extract_strided_slice %26 {offsets = [0, 32], sizes = [8, 128], strides = [1, 1]} : vector<8x162xf32> to vector<8x128xf32>
    %c0_i32_31 = arith.constant 0 : i32
    %75 = vector.broadcast %c0_i32_31 : i32 to vector<1x128xi32>
    %76 = arith.cmpi ne, %43, %75 : vector<1x128xi32>
    %cst_32 = arith.constant 0.000000e+00 : f32
    %77 = vector.broadcast %cst_32 : f32 to vector<8x128xf32>
    %78 = vector.shape_cast %76 : vector<1x128xi1> to vector<1x128xi1>
    %79 = vector.broadcast %78 : vector<1x128xi1> to vector<8x128xi1>
    %80 = arith.select %79, %74, %77 : vector<8x128xi1>, vector<8x128xf32>
    %81 = vector.extract_strided_slice %26 {offsets = [0, 33], sizes = [8, 128], strides = [1, 1]} : vector<8x162xf32> to vector<8x128xf32>
    %82 = vector.extract_strided_slice %26 {offsets = [0, 34], sizes = [8, 128], strides = [1, 1]} : vector<8x162xf32> to vector<8x128xf32>
    %c15_i32_33 = arith.constant 15 : i32
    %83 = vector.broadcast %c15_i32_33 : i32 to vector<1x128xi32>
    %84 = arith.cmpi ne, %43, %83 : vector<1x128xi32>
    %cst_34 = arith.constant 0.000000e+00 : f32
    %85 = vector.broadcast %cst_34 : f32 to vector<8x128xf32>
    %86 = vector.shape_cast %84 : vector<1x128xi1> to vector<1x128xi1>
    %87 = vector.broadcast %86 : vector<1x128xi1> to vector<8x128xi1>
    %88 = arith.select %87, %82, %85 : vector<8x128xi1>, vector<8x128xf32>
    %89 = tpu.concatenate %50, %51, %58, %65, %66, %73, %80, %81, %88 in 0 : vector<8x128xf32>, vector<8x128xf32>, vector<8x128xf32>, vector<8x128xf32>, vector<8x128xf32>, vector<8x128xf32>, vector<8x128xf32>, vector<8x128xf32>, vector<8x128xf32> -> vector<72x128xf32>
    %c0_35 = arith.constant 0 : index
    %c0_36 = arith.constant 0 : index
    %90 = vector.load %arg8[%c0_35, %c0_36] : memref<4x72xf32, #tpu.memory_space<vmem>>, vector<4x72xf32>
    %cst_37 = arith.constant dense<0.000000e+00> : vector<4x128xf32>
    %91 = tpu.matmul %90, %89, %cst_37 {dimension_numbers = #tpu.dot_dimension_numbers<[1], [0], [0], [1], [0, 0, 1, 1], [], []>} : vector<4x72xf32>, vector<72x128xf32>, vector<4x128xf32> -> vector<4x128xf32>
    %c0_38 = arith.constant 0 : index
    %c0_39 = arith.constant 0 : index
    %92 = vector.load %arg9[%c0_38, %c0_39] : memref<4x1xf32, #tpu.memory_space<vmem>>, vector<4x1xf32>
    %93 = vector.broadcast %92 : vector<4x1xf32> to vector<4x128xf32>
    %94 = arith.mulf %91, %93 : vector<4x128xf32>
    %c0_40 = arith.constant 0 : index
    %c0_41 = arith.constant 0 : index
    %95 = vector.load %arg10[%c0_40, %c0_41] : memref<4x1xf32, #tpu.memory_space<vmem>>, vector<4x1xf32>
    %96 = vector.broadcast %95 : vector<4x1xf32> to vector<4x128xf32>
    %97 = arith.addf %94, %96 : vector<4x128xf32>
    %cst_42 = arith.constant 0.000000e+00 : f32
    %98 = vector.broadcast %cst_42 : f32 to vector<4x128xf32>
    %99 = arith.maximumf %97, %98 : vector<4x128xf32>
    %c0_43 = arith.constant 0 : index
    %c0_44 = arith.constant 0 : index
    %c0_45 = arith.constant 0 : index
    %100 = vector.load %arg2[%c0_43, %c0_44, %c0_45] : memref<1x4x128xf32, #tpu.memory_space<vmem>>, vector<1x4x128xf32>
    %101 = vector.shape_cast %100 : vector<1x4x128xf32> to vector<4x128xf32>
    %102 = arith.addf %99, %101 : vector<4x128xf32>
    %c0_46 = arith.constant 0 : index
    %c0_47 = arith.constant 0 : index
    %c0_48 = arith.constant 0 : index
    %103 = vector.load %arg11[%c0_46, %c0_47, %c0_48] : memref<1x4x128xf32, #tpu.memory_space<vmem>>, vector<1x4x128xf32>
    %104 = vector.shape_cast %103 : vector<1x4x128xf32> to vector<4x128xf32>
    %105 = vector.shape_cast %102 : vector<4x128xf32> to vector<1x4x128xf32>
    tpu.vector_store %arg11[%c0_46, %c0_47, %c0_48], %105 {strides = array<i32>} : memref<1x4x128xf32, #tpu.memory_space<vmem>>, vector<1x4x128xf32>,
    return
  }
  func.func @transform_0(%arg0: i32, %arg1: i32) -> (i32, i32, i32) {
    %c0_i32 = arith.constant 0 : i32
    %c0_i32_0 = arith.constant 0 : i32
    return %arg0, %c0_i32, %arg1 : i32, i32, i32
  }
  func.func @transform_1(%arg0: i32, %arg1: i32) -> (i32, i32, i32, i32) {
    %c0_i32 = arith.constant 0 : i32
    %c0_i32_0 = arith.constant 0 : i32
    %c0_i32_1 = arith.constant 0 : i32
    return %arg0, %arg1, %c0_i32, %c0_i32_0 : i32, i32, i32, i32
  }
  func.func @transform_2(%arg0: i32, %arg1: i32) -> (i32, i32, i32, i32) {
    %c0_i32 = arith.constant 0 : i32
    %c0_i32_0 = arith.constant 0 : i32
    %c0_i32_1 = arith.constant 0 : i32
    return %arg0, %arg1, %c0_i32, %c0_i32_0 : i32, i32, i32, i32
  }
  func.func @transform_3(%arg0: i32, %arg1: i32) -> (i32, i32) {
    %c0_i32 = arith.constant 0 : i32
    %c0_i32_0 = arith.constant 0 : i32
    %c0_i32_1 = arith.constant 0 : i32
    return %c0_i32, %c0_i32_0 : i32, i32
  }
  func.func @transform_4(%arg0: i32, %arg1: i32) -> (i32, i32) {
    %c0_i32 = arith.constant 0 : i32
    %c0_i32_0 = arith.constant 0 : i32
    %c0_i32_1 = arith.constant 0 : i32
    return %c0_i32, %c0_i32_0 : i32, i32
  }
  func.func @transform_5(%arg0: i32, %arg1: i32) -> (i32, i32) {
    %c0_i32 = arith.constant 0 : i32
    %c0_i32_0 = arith.constant 0 : i32
    %c0_i32_1 = arith.constant 0 : i32
    return %c0_i32, %c0_i32_0 : i32, i32
  }
  func.func @transform_6(%arg0: i32, %arg1: i32) -> (i32, i32) {
    %c0_i32 = arith.constant 0 : i32
    %c0_i32_0 = arith.constant 0 : i32
    %c0_i32_1 = arith.constant 0 : i32
    return %c0_i32, %c0_i32_0 : i32, i32
  }
  func.func @transform_7(%arg0: i32, %arg1: i32) -> (i32, i32) {
    %c0_i32 = arith.constant 0 : i32
    %c0_i32_0 = arith.constant 0 : i32
    %c0_i32_1 = arith.constant 0 : i32
    return %c0_i32, %c0_i32_0 : i32, i32
  }
  func.func @transform_8(%arg0: i32, %arg1: i32) -> (i32, i32) {
    %c0_i32 = arith.constant 0 : i32
    %c0_i32_0 = arith.constant 0 : i32
    %c0_i32_1 = arith.constant 0 : i32
    return %c0_i32, %c0_i32_0 : i32, i32
  }
  func.func @transform_9(%arg0: i32, %arg1: i32) -> (i32, i32, i32) {
    %c0_i32 = arith.constant 0 : i32
    %c0_i32_0 = arith.constant 0 : i32
    return %arg0, %c0_i32, %arg1 : i32, i32, i32
  }
}

</mosaic_0001>

<llo_original>
// kernel: tpu_custom_call.1
$region0: #{tpu_custom_call.1}
  #allocation0 [shape = 'u32[]', space=smem, size = 0x4, offset = 0x4, fixed_abs, tag = 'smem constant byte address 0x4 - core index']
  #allocation1 [shape = 'u32[144,128]{1,0:T(1,128)}', space=vmem, size = 0x12000, scoped, tag = 'internal scratch']
  %s0 = inlined_call_operand.vmem [shape: f32[2,4,256], index: 0, kind: input, shape index: {}]
  %s1 = inlined_call_operand.vmem [shape: f32[2,2,4,16], index: 1, kind: input, shape index: {}]
  %s2 = inlined_call_operand.hbm [shape: f32[2,2,4,16], index: 2, kind: input, shape index: {}]
  %s3 = inlined_call_operand.vmem [shape: f32[8,4], index: 3, kind: input, shape index: {}]
  %s4 = inlined_call_operand.vmem [shape: f32[8,1], index: 4, kind: input, shape index: {}]
  %s5 = inlined_call_operand.vmem [shape: f32[8,1], index: 5, kind: input, shape index: {}]
  %s6 = inlined_call_operand.vmem [shape: f32[4,72], index: 6, kind: input, shape index: {}]
  %s7 = inlined_call_operand.vmem [shape: f32[4,1], index: 7, kind: input, shape index: {}]
  %s8 = inlined_call_operand.vmem [shape: f32[4,1], index: 8, kind: input, shape index: {}]
  %s9 = inlined_call_operand.hbm [shape: f32[2,4,256], index: 9, kind: output, shape index: {}]
  %s10 = sld [smem:[#allocation0]]
  $region73: #{tpu_custom_call.1} parent=0
    _
  %s12 = ssub.s32 1, %s10
  %s13 = scalar_select 0, %s12, %s10
  $region1: #{tpu_custom_call.1} parent=0
    #allocation2 [shape = 'u8[4096]{0}', space=vmem, size = 0x1000, scoped, tag = 'input window, operand 2']
    #allocation3 [shape = 's32[2]{0}', space=sflag, size = 0x8, scoped, tag = 'scoped memory for tpu_custom_call.1']
    #allocation4 [shape = 's32[2]{0}', space=sflag, size = 0x8, scoped, tag = 'scoped memory for tpu_custom_call.1']
    #allocation5 [shape = 'u8[4096]{0}', space=vmem, size = 0x1000, scoped, tag = 'output window, operand 0']
    %14 = vsyncpa [#allocation3], 0
    %s15 = scalar_lea.sflag [#allocation3], 1
    %16 = vsyncpa %s15, 0
    %17 = vsyncpa [#allocation4], 0
    %s18 = scalar_lea.sflag [#allocation4], 1
    %19 = vsyncpa %s18, 0
    loop: start=0, step=1, limit=6
    $region2: #{tpu_custom_call.1} parent=1 // loop_pre_header
      _
    $region3: #{tpu_custom_call.1} parent=1 // loop_header
      %s21 = sphi 0, %s25
      %p22 = scmp.ge.s32.totalorder %s21, 6
      %s28 = sphi 0, %s40
      %s29 = sphi 0, %s36
      %s30 = sphi 0, %s28
      %s31 = sphi 0, %s29
      %s32 = sphi 0, %s30
      %s33 = sphi 0, %s31
      %s45 = sphi 0, %s47
      %s48 = sphi 0, %s45
      %s49 = sphi 0, %s48
      %s65 = sphi 0, %s49
      %s73 = sphi 0, %s75
      %s76 = sphi 0, %s73
      %s77 = sphi 0, %s76
      %s93 = sphi 0, %s77
      %s101 = sphi 0, %s103
      %s104 = sphi 0, %s101
      %s105 = sphi 0, %s104
      %s121 = sphi 0, %s105
      %s125 = sphi 0, %s125
      %s127 = sphi 0, %s125
      %s128 = sphi 0, %s127
      %s142 = sphi 0, %s128
      %s146 = sphi 0, %s146
      %s148 = sphi 0, %s146
      %s149 = sphi 0, %s148
      %s163 = sphi 0, %s149
      %s167 = sphi 0, %s167
      %s169 = sphi 0, %s167
      %s170 = sphi 0, %s169
      %s184 = sphi 0, %s170
      %s188 = sphi 0, %s188
      %s190 = sphi 0, %s188
      %s191 = sphi 0, %s190
      %s205 = sphi 0, %s191
      %s209 = sphi 0, %s209
      %s211 = sphi 0, %s209
      %s212 = sphi 0, %s211
      %s226 = sphi 0, %s212
      %s230 = sphi 0, %s230
      %s232 = sphi 0, %s230
      %s233 = sphi 0, %s232
      %s247 = sphi 0, %s233
      %s255 = sphi 0, %s257
      %s258 = sphi 0, %s255
      %s259 = sphi 0, %s258
      %s275 = sphi 0, %s259
    $region4: #{tpu_custom_call.1} parent=1 // loop_header_branch
      %24 = sbr.rel (%p22) target = $region8
    $region5: #{tpu_custom_call.1} parent=1 // loop_body
      %s26 = ssub.s32 %s21, 1
      %s27 = ssub.s32 %s21, 2
      %s34 = sadd.s32 1, %s29
      %p35 = scmp.ge.s32.totalorder %s34, 2
      %s36 = scalar_select %p35, 0, %s34
      %s37 = sadd.s32 1, %s28
      %s38 = scalar_select %p35, %s37, %s28
      %p39 = scmp.ge.s32.totalorder %s38, 2
      %s40 = scalar_select %p39, 0, %s38
      %s41 = ssub.s32 %s28, %s40
      %s42 = ssub.s32 %s29, %s36
      %s43 = sor.u32 %s41, %s42
      %p44 = scmp.eq.s32.totalorder %s43, 0
      %s46 = sadd.s32 %s45, 1
      %s47 = scalar_select %p44, %s45, %s46
      %p50 = pneg %p44
      %p51 = scmp.eq.s32.totalorder %s21, 3
      %p52 = por %p50, %p51
      %p53 = scmp.ne.s32.totalorder %s45, %s48
      %p54 = scmp.eq.s32.totalorder %s21, 0
      %p55 = por %p53, %p54
      %p56 = scmp.ne.s32.totalorder %s45, %s48
      %p57 = scmp.eq.s32.totalorder %s26, 3
      %p58 = por %p56, %p57
      %p59 = scmp.ne.s32.totalorder %s48, %s49
      %p60 = scmp.eq.s32.totalorder %s26, 0
      %p61 = por %p59, %p60
      %p62 = scmp.ne.s32.totalorder %s48, %s49
      %p63 = scmp.eq.s32.totalorder %s27, 3
      %p64 = por %p62, %p63
      %p66 = scmp.ne.s32.totalorder %s49, %s65
      %p67 = scmp.eq.s32.totalorder %s27, 0
      %p68 = por %p66, %p67
      %s69 = ssub.s32 %s28, %s40
      %s70 = ssub.s32 %s29, %s36
      %s71 = sor.u32 %s69, %s70
      %p72 = scmp.eq.s32.totalorder %s71, 0
      %s74 = sadd.s32 %s73, 1
      %s75 = scalar_select %p72, %s73, %s74
      %p78 = pneg %p72
      %p79 = scmp.eq.s32.totalorder %s21, 3
      %p80 = por %p78, %p79
      %p81 = scmp.ne.s32.totalorder %s73, %s76
      %p82 = scmp.eq.s32.totalorder %s21, 0
      %p83 = por %p81, %p82
      %p84 = scmp.ne.s32.totalorder %s73, %s76
      %p85 = scmp.eq.s32.totalorder %s26, 3
      %p86 = por %p84, %p85
      %p87 = scmp.ne.s32.totalorder %s76, %s77
      %p88 = scmp.eq.s32.totalorder %s26, 0
      %p89 = por %p87, %p88
      %p90 = scmp.ne.s32.totalorder %s76, %s77
      %p91 = scmp.eq.s32.totalorder %s27, 3
      %p92 = por %p90, %p91
      %p94 = scmp.ne.s32.totalorder %s77, %s93
      %p95 = scmp.eq.s32.totalorder %s27, 0
      %p96 = por %p94, %p95
      %s97 = ssub.s32 %s28, %s40
      %s98 = ssub.s32 %s29, %s36
      %s99 = sor.u32 %s97, %s98
      %p100 = scmp.eq.s32.totalorder %s99, 0
      %s102 = sadd.s32 %s101, 1
      %s103 = scalar_select %p100, %s101, %s102
      %p106 = pneg %p100
      %p107 = scmp.eq.s32.totalorder %s21, 3
      %p108 = por %p106, %p107
      %p109 = scmp.ne.s32.totalorder %s101, %s104
      %p110 = scmp.eq.s32.totalorder %s21, 0
      %p111 = por %p109, %p110
      %p112 = scmp.ne.s32.totalorder %s101, %s104
      %p113 = scmp.eq.s32.totalorder %s26, 3
      %p114 = por %p112, %p113
      %p115 = scmp.ne.s32.totalorder %s104, %s105
      %p116 = scmp.eq.s32.totalorder %s26, 0
      %p117 = por %p115, %p116
      %p118 = scmp.ne.s32.totalorder %s104, %s105
      %p119 = scmp.eq.s32.totalorder %s27, 3
      %p120 = por %p118, %p119
      %p122 = scmp.ne.s32.totalorder %s105, %s121
      %p123 = scmp.eq.s32.totalorder %s27, 0
      %p124 = por %p122, %p123
      %s126 = sadd.s32 %s125, 1
      %p129 = scmp.eq.s32.totalorder %s21, 3
      %p130 = scmp.ne.s32.totalorder %s125, %s127
      %p131 = scmp.eq.s32.totalorder %s21, 0
      %p132 = por %p130, %p131
      %p133 = scmp.ne.s32.totalorder %s125, %s127
      %p134 = scmp.eq.s32.totalorder %s26, 3
      %p135 = por %p133, %p134
      %p136 = scmp.ne.s32.totalorder %s127, %s128
      %p137 = scmp.eq.s32.totalorder %s26, 0
      %p138 = por %p136, %p137
      %p139 = scmp.ne.s32.totalorder %s127, %s128
      %p140 = scmp.eq.s32.totalorder %s27, 3
      %p141 = por %p139, %p140
      %p143 = scmp.ne.s32.totalorder %s128, %s142
      %p144 = scmp.eq.s32.totalorder %s27, 0
      %p145 = por %p143, %p144
      %s147 = sadd.s32 %s146, 1
      %p150 = scmp.eq.s32.totalorder %s21, 3
      %p151 = scmp.ne.s32.totalorder %s146, %s148
      %p152 = scmp.eq.s32.totalorder %s21, 0
      %p153 = por %p151, %p152
      %p154 = scmp.ne.s32.totalorder %s146, %s148
      %p155 = scmp.eq.s32.totalorder %s26, 3
      %p156 = por %p154, %p155
      %p157 = scmp.ne.s32.totalorder %s148, %s149
      %p158 = scmp.eq.s32.totalorder %s26, 0
      %p159 = por %p157, %p158
      %p160 = scmp.ne.s32.totalorder %s148, %s149
      %p161 = scmp.eq.s32.totalorder %s27, 3
      %p162 = por %p160, %p161
      %p164 = scmp.ne.s32.totalorder %s149, %s163
      %p165 = scmp.eq.s32.totalorder %s27, 0
      %p166 = por %p164, %p165
      %s168 = sadd.s32 %s167, 1
      %p171 = scmp.eq.s32.totalorder %s21, 3
      %p172 = scmp.ne.s32.totalorder %s167, %s169
      %p173 = scmp.eq.s32.totalorder %s21, 0
      %p174 = por %p172, %p173
      %p175 = scmp.ne.s32.totalorder %s167, %s169
      %p176 = scmp.eq.s32.totalorder %s26, 3
      %p177 = por %p175, %p176
      %p178 = scmp.ne.s32.totalorder %s169, %s170
      %p179 = scmp.eq.s32.totalorder %s26, 0
      %p180 = por %p178, %p179
      %p181 = scmp.ne.s32.totalorder %s169, %s170
      %p182 = scmp.eq.s32.totalorder %s27, 3
      %p183 = por %p181, %p182
      %p185 = scmp.ne.s32.totalorder %s170, %s184
      %p186 = scmp.eq.s32.totalorder %s27, 0
      %p187 = por %p185, %p186
      %s189 = sadd.s32 %s188, 1
      %p192 = scmp.eq.s32.totalorder %s21, 3
      %p193 = scmp.ne.s32.totalorder %s188, %s190
      %p194 = scmp.eq.s32.totalorder %s21, 0
      %p195 = por %p193, %p194
      %p196 = scmp.ne.s32.totalorder %s188, %s190
      %p197 = scmp.eq.s32.totalorder %s26, 3
      %p198 = por %p196, %p197
      %p199 = scmp.ne.s32.totalorder %s190, %s191
      %p200 = scmp.eq.s32.totalorder %s26, 0
      %p201 = por %p199, %p200
      %p202 = scmp.ne.s32.totalorder %s190, %s191
      %p203 = scmp.eq.s32.totalorder %s27, 3
      %p204 = por %p202, %p203
      %p206 = scmp.ne.s32.totalorder %s191, %s205
      %p207 = scmp.eq.s32.totalorder %s27, 0
      %p208 = por %p206, %p207
      %s210 = sadd.s32 %s209, 1
      %p213 = scmp.eq.s32.totalorder %s21, 3
      %p214 = scmp.ne.s32.totalorder %s209, %s211
      %p215 = scmp.eq.s32.totalorder %s21, 0
      %p216 = por %p214, %p215
      %p217 = scmp.ne.s32.totalorder %s209, %s211
      %p218 = scmp.eq.s32.totalorder %s26, 3
      %p219 = por %p217, %p218
      %p220 = scmp.ne.s32.totalorder %s211, %s212
      %p221 = scmp.eq.s32.totalorder %s26, 0
      %p222 = por %p220, %p221
      %p223 = scmp.ne.s32.totalorder %s211, %s212
      %p224 = scmp.eq.s32.totalorder %s27, 3
      %p225 = por %p223, %p224
      %p227 = scmp.ne.s32.totalorder %s212, %s226
      %p228 = scmp.eq.s32.totalorder %s27, 0
      %p229 = por %p227, %p228
      %s231 = sadd.s32 %s230, 1
      %p234 = scmp.eq.s32.totalorder %s21, 3
      %p235 = scmp.ne.s32.totalorder %s230, %s232
      %p236 = scmp.eq.s32.totalorder %s21, 0
      %p237 = por %p235, %p236
      %p238 = scmp.ne.s32.totalorder %s230, %s232
      %p239 = scmp.eq.s32.totalorder %s26, 3
      %p240 = por %p238, %p239
      %p241 = scmp.ne.s32.totalorder %s232, %s233
      %p242 = scmp.eq.s32.totalorder %s26, 0
      %p243 = por %p241, %p242
      %p244 = scmp.ne.s32.totalorder %s232, %s233
      %p245 = scmp.eq.s32.totalorder %s27, 3
      %p246 = por %p244, %p245
      %p248 = scmp.ne.s32.totalorder %s233, %s247
      %p249 = scmp.eq.s32.totalorder %s27, 0
      %p250 = por %p248, %p249
      %s251 = ssub.s32 %s28, %s40
      %s252 = ssub.s32 %s29, %s36
      %s253 = sor.u32 %s251, %s252
      %p254 = scmp.eq.s32.totalorder %s253, 0
      %s256 = sadd.s32 %s255, 1
      %s257 = scalar_select %p254, %s255, %s256
      %p260 = pneg %p254
      %p261 = scmp.eq.s32.totalorder %s21, 3
      %p262 = por %p260, %p261
      %p263 = scmp.ne.s32.totalorder %s255, %s258
      %p264 = scmp.eq.s32.totalorder %s21, 0
      %p265 = por %p263, %p264
      %p266 = scmp.ne.s32.totalorder %s255, %s258
      %p267 = scmp.eq.s32.totalorder %s26, 3
      %p268 = por %p266, %p267
      %p269 = scmp.ne.s32.totalorder %s258, %s259
      %p270 = scmp.eq.s32.totalorder %s26, 0
      %p271 = por %p269, %p270
      %p272 = scmp.ne.s32.totalorder %s258, %s259
      %p273 = scmp.eq.s32.totalorder %s27, 3
      %p274 = por %p272, %p273
      %p276 = scmp.ne.s32.totalorder %s259, %s275
      %p277 = scmp.eq.s32.totalorder %s27, 0
      %p278 = por %p276, %p277
      %p279 = scmp.le.s32.totalorder 1, %s21
      %p280 = scmp.lt.s32.totalorder %s21, 5
      %p281 = pnand %p279, %p280
      %p282 = pneg %p281
      // Predicated region
      $region9: #{tpu_custom_call.1} parent=5 // pred_check
        _
      $region10: #{tpu_custom_call.1} parent=5 // pred_check_branch
        %284 = sbr.rel (%p281) target = $region12
      $region11: #{tpu_custom_call.1} parent=5 // pred_region
        %s285 = ssub.s32 %s21, 1
        // Predicated region
        $region13: #{tpu_custom_call.1} parent=11 // pred_check
          %p286 = pneg %p138
        $region14: #{tpu_custom_call.1} parent=11 // pred_check_branch
          %288 = sbr.rel (%p286) target = $region16
        $region15: #{tpu_custom_call.1} parent=11 // pred_region
          _
        $region16: #{tpu_custom_call.1} parent=11 // pred_fallthru
          _
        // Predicated region
        $region17: #{tpu_custom_call.1} parent=11 // pred_check
          %p289 = pneg %p159
        $region18: #{tpu_custom_call.1} parent=11 // pred_check_branch
          %291 = sbr.rel (%p289) target = $region20
        $region19: #{tpu_custom_call.1} parent=11 // pred_region
          _
        $region20: #{tpu_custom_call.1} parent=11 // pred_fallthru
          _
        // Predicated region
        $region21: #{tpu_custom_call.1} parent=11 // pred_check
          %p292 = pneg %p180
        $region22: #{tpu_custom_call.1} parent=11 // pred_check_branch
          %294 = sbr.rel (%p292) target = $region24
        $region23: #{tpu_custom_call.1} parent=11 // pred_region
          _
        $region24: #{tpu_custom_call.1} parent=11 // pred_fallthru
          _
        // Predicated region
        $region25: #{tpu_custom_call.1} parent=11 // pred_check
          %p295 = pneg %p201
        $region26: #{tpu_custom_call.1} parent=11 // pred_check_branch
          %297 = sbr.rel (%p295) target = $region28
        $region27: #{tpu_custom_call.1} parent=11 // pred_region
          _
        $region28: #{tpu_custom_call.1} parent=11 // pred_fallthru
          _
        // Predicated region
        $region29: #{tpu_custom_call.1} parent=11 // pred_check
          %p298 = pneg %p222
        $region30: #{tpu_custom_call.1} parent=11 // pred_check_branch
          %300 = sbr.rel (%p298) target = $region32
        $region31: #{tpu_custom_call.1} parent=11 // pred_region
          _
        $region32: #{tpu_custom_call.1} parent=11 // pred_fallthru
          _
        // Predicated region
        $region33: #{tpu_custom_call.1} parent=11 // pred_check
          %p301 = pneg %p243
        $region34: #{tpu_custom_call.1} parent=11 // pred_check_branch
          %303 = sbr.rel (%p301) target = $region36
        $region35: #{tpu_custom_call.1} parent=11 // pred_region
          _
        $region36: #{tpu_custom_call.1} parent=11 // pred_fallthru
          _
      $region12: #{tpu_custom_call.1} parent=5 // pred_fallthru
        _
      %p304 = scmp.lt.s32.totalorder %s21, 4
      // Predicated region
      $region37: #{tpu_custom_call.1} parent=5 // pred_check
        %p305 = pneg %p304
      $region38: #{tpu_custom_call.1} parent=5 // pred_check_branch
        %307 = sbr.rel (%p305) target = $region40
      $region39: #{tpu_custom_call.1} parent=5 // pred_region
        // Predicated region
        $region41: #{tpu_custom_call.1} parent=39 // pred_check
          %p308 = pneg %p55
        $region42: #{tpu_custom_call.1} parent=39 // pred_check_branch
          %310 = sbr.rel (%p308) target = $region44
        $region43: #{tpu_custom_call.1} parent=39 // pred_region
          %p311 = scmp.lt.s32.totalorder %s28, 1
          %s312 = scalar_select %p311, %s28, 1
          %p313 = scmp.lt.s32.totalorder %s29, 1
          %s314 = scalar_select %p313, %s29, 1
          %s315 = smul.addr %s312, 2
          %s316 = sadd.s32 %s314, %s315
          %s317 = smul.addr %s316, 4
          %s318 = scalar_lea.vmem %s0, %s317
        $region44: #{tpu_custom_call.1} parent=39 // pred_fallthru
          _
        // Predicated region
        $region45: #{tpu_custom_call.1} parent=39 // pred_check
          %p319 = pneg %p83
        $region46: #{tpu_custom_call.1} parent=39 // pred_check_branch
          %321 = sbr.rel (%p319) target = $region48
        $region47: #{tpu_custom_call.1} parent=39 // pred_region
          %p322 = scmp.lt.s32.totalorder %s28, 1
          %s323 = scalar_select %p322, %s28, 1
          %p324 = scmp.lt.s32.totalorder %s29, 1
          %s325 = scalar_select %p324, %s29, 1
          %s326 = smul.addr %s323, 2
          %s327 = sadd.s32 %s325, %s326
          %s328 = smul.addr %s327, 4
          %s329 = scalar_lea.vmem %s1, %s328
        $region48: #{tpu_custom_call.1} parent=39 // pred_fallthru
          _
        // Predicated region
        $region49: #{tpu_custom_call.1} parent=39 // pred_check
          %p330 = pneg %p111
        $region50: #{tpu_custom_call.1} parent=39 // pred_check_branch
          %332 = sbr.rel (%p330) target = $region52
        $region51: #{tpu_custom_call.1} parent=39 // pred_region
          %s333 = sand.u32 %s101, 1
          %s334 = scalar_lea.sflag [#allocation3], %s333
          %s335 = sand.u32 %s101, 1
          %s336 = smul.addr %s335, 4
          %s337 = scalar_lea.vmem [#allocation2], %s336
          %s339 = ssub.s32 64, 64
          %340 = vsyncadd %s334, %s339
          %s341 = smul.addr %s28, 2
          %s342 = sadd.s32 %s29, %s341
          %s343 = smul.addr %s342, 64
          %s344 = scalar_lea.hbm %s2, %s343
          %s346 = sshll.u32 %s337, 4
          %s347 = int_to_ptr.vmem [resolvable:$true] %s346
          %349 = dma.hbm_to_vmem [thread:$0]  %s344, 64, %s347, %s334
        $region52: #{tpu_custom_call.1} parent=39 // pred_fallthru
          _
      $region40: #{tpu_custom_call.1} parent=5 // pred_fallthru
        _
      %p350 = scmp.le.s32.totalorder 1, %s21
      %p351 = scmp.lt.s32.totalorder %s21, 5
      %p352 = pnand %p350, %p351
      %p353 = pneg %p352
      // Predicated region
      $region53: #{tpu_custom_call.1} parent=5 // pred_check
        _
      $region54: #{tpu_custom_call.1} parent=5 // pred_check_branch
        %355 = sbr.rel (%p352) target = $region56
      $region55: #{tpu_custom_call.1} parent=5 // pred_region
        %s356 = ssub.s32 %s21, 1
        %s357 = sand.u32 %s104, 1
        %s358 = scalar_lea.sflag [#allocation3], %s357
        %s359 = sand.u32 %s104, 1
        %s360 = smul.addr %s359, 4
        %s361 = scalar_lea.vmem [#allocation2], %s360
        // Predicated region
        $region57: #{tpu_custom_call.1} parent=55 // pred_check
          %p362 = pneg %p117
        $region58: #{tpu_custom_call.1} parent=55 // pred_check_branch
          %364 = sbr.rel (%p362) target = $region60
        $region59: #{tpu_custom_call.1} parent=55 // pred_region
          %365 = dma.done %s358, 64
        $region60: #{tpu_custom_call.1} parent=55 // pred_fallthru
          _
        %p366 = scmp.lt.s32.totalorder %s30, 1
        %s367 = scalar_select %p366, %s30, 1
        %p368 = scmp.lt.s32.totalorder %s31, 1
        %s369 = scalar_select %p368, %s31, 1
        %s370 = smul.addr %s367, 2
        %s371 = sadd.s32 %s369, %s370
        %s372 = smul.addr %s371, 4
        %s373 = scalar_lea.vmem %s0, %s372
        %p374 = pneg %p61
        %p375 = pneg %p58
        %p376 = scmp.lt.s32.totalorder %s30, 1
        %s377 = scalar_select %p376, %s30, 1
        %p378 = scmp.lt.s32.totalorder %s31, 1
        %s379 = scalar_select %p378, %s31, 1
        %s380 = smul.addr %s377, 2
        %s381 = sadd.s32 %s379, %s380
        %s382 = smul.addr %s381, 4
        %s383 = scalar_lea.vmem %s1, %s382
        %p384 = pneg %p89
        %p385 = pneg %p86
        %s386 = sand.u32 %s104, 1
        %s387 = scalar_lea.sflag [#allocation3], %s386
        %s388 = sand.u32 %s104, 1
        %s389 = smul.addr %s388, 4
        %s390 = scalar_lea.vmem [#allocation2], %s389
        %p391 = pneg %p117
        %p392 = pneg %p114
        %p393 = pneg %p138
        %p394 = pneg %p135
        %p395 = pneg %p159
        %p396 = pneg %p156
        %p397 = pneg %p180
        %p398 = pneg %p177
        %p399 = pneg %p201
        %p400 = pneg %p198
        %p401 = pneg %p222
        %p402 = pneg %p219
        %p403 = pneg %p243
        %p404 = pneg %p240
        %p405 = pneg %p271
        %p406 = pneg %p268
        %s407 = sand.u32 %s258, 1
        %s408 = scalar_lea.sflag [#allocation4], %s407
        %s409 = sand.u32 %s258, 1
        %s410 = smul.addr %s409, 4
        %s411 = scalar_lea.vmem [#allocation5], %s410
        %p412 = scmp.lt.s32.totalorder %s30, 1
        %s413 = scalar_select %p412, %s30, 1
        %p414 = scmp.lt.s32.totalorder %s31, 1
        %s415 = scalar_select %p414, %s31, 1
        %s416 = smul.addr %s413, 2
        %s417 = sadd.s32 %s415, %s416
        %s418 = smul.addr %s417, 4
        %s419 = scalar_lea.vmem %s0, %s418
        %p420 = scmp.lt.s32.totalorder %s30, 1
        %s421 = scalar_select %p420, %s30, 1
        %p422 = scmp.lt.s32.totalorder %s31, 1
        %s423 = scalar_select %p422, %s31, 1
        %s424 = smul.addr %s421, 2
        %s425 = sadd.s32 %s423, %s424
        %s426 = smul.addr %s425, 4
        %s427 = scalar_lea.vmem %s1, %s426
        %v428 = vld [vmem:[%s419] sm:$0xf]
        %v429 = vld [vmem:[%s427] sm:$0xf]
        %v430 = vld [vmem:[%s361] sm:$0xf]
        %432 = vrot.lane.b32.xlu0 %v428, 16
        %v433 = vpop.permute.xlu0 %432
        %436 = vrot.lane.b32.xlu0 %v430, 16
        %v437 = vpop.permute.xlu0 %436
        %vm439 = vcmask 130048
        %v440 = vsel %vm439, %v429, %v433
        %v441 = vsel %vm439, %v433, %v437
        %v442 = vld [vmem:[%s3] sm:$0xff]
        %vm443 = vcmask 31744
        %v445 = vsel %vm443, %v442, 0
        %vm447 = vcmask 1043456
        %v449 = vsel %vm447, %v440, 0
        %v452 = vsel %vm447, %v441, 0
        %454 = vmatprep.subr.mxu0 0.0
        %455 = vmatpush1.msra.mxu0 0.0
        %456 = vmatprep.subr.mxu0 0.0
        %457 = vmatpush1.msra.mxu0 0.0
        %458 = vmatprep.subr.mxu0 0.0
        %459 = vmatpush1.msra.mxu0 0.0
        %460 = vmatprep.subr.mxu0 0.0
        %461 = vmatpush1.msra.mxu0 0.0
        %462 = vmatprep.subr.mxu0 0.0
        %463 = vmatpush1.msra.mxu0 0.0
        %464 = vmatprep.subr.mxu0 0.0
        %465 = vmatpush1.msra.mxu0 0.0
        %466 = vmatprep.subr.mxu0 0.0
        %467 = vmatpush1.msra.mxu0 0.0
        %468 = vmatprep.subr.mxu0 0.0
        %469 = vmatpush1.msra.mxu0 0.0
        %470 = vmatprep.subr.mxu0 0.0
        %471 = vmatpush1.msra.mxu0 0.0
        %472 = vmatprep.subr.mxu0 0.0
        %473 = vmatpush1.msra.mxu0 0.0
        %474 = vmatprep.subr.mxu0 0.0
        %475 = vmatpush1.msra.mxu0 0.0
        %476 = vmatprep.subr.mxu0 0.0
        %477 = vmatpush1.msra.mxu0 0.0
        %478 = vmatprep.subr.mxu0 0.0
        %479 = vmatpush1.msra.mxu0 0.0
        %480 = vmatprep.subr.mxu0 0.0
        %481 = vmatpush1.msra.mxu0 0.0
        %482 = vmatprep.subr.mxu0 0.0
        %483 = vmatpush1.msra.mxu0 0.0
        %484 = vmatprep.subr.mxu0 %v452
        %485 = vmatpush1.msra.mxu0 %v449
        %486 = vmatprep.subr.mxu0 0.0
        %487 = vmatpush2.msra.mxu0 0.0
        %488 = vmatprep.subr.mxu0 0.0
        %489 = vmatpush2.msra.mxu0 0.0
        %490 = vmatprep.subr.mxu0 0.0
        %491 = vmatpush2.msra.mxu0 0.0
        %492 = vmatprep.subr.mxu0 0.0
        %493 = vmatpush2.msra.mxu0 0.0
        %494 = vmatprep.subr.mxu0 0.0
        %495 = vmatpush2.msra.mxu0 0.0
        %496 = vmatprep.subr.mxu0 0.0
        %497 = vmatpush2.msra.mxu0 0.0
        %498 = vmatprep.subr.mxu0 0.0
        %499 = vmatpush2.msra.mxu0 0.0
        %500 = vmatprep.subr.mxu0 0.0
        %501 = vmatpush2.msra.mxu0 0.0
        %502 = vmatprep.subr.mxu0 0.0
        %503 = vmatpush2.msra.mxu0 0.0
        %504 = vmatprep.subr.mxu0 0.0
        %505 = vmatpush2.msra.mxu0 0.0
        %506 = vmatprep.subr.mxu0 0.0
        %507 = vmatpush2.msra.mxu0 0.0
        %508 = vmatprep.subr.mxu0 0.0
        %509 = vmatpush2.msra.mxu0 0.0
        %510 = vmatprep.subr.mxu0 0.0
        %511 = vmatpush2.msra.mxu0 0.0
        %512 = vmatprep.subr.mxu0 0.0
        %513 = vmatpush2.msra.mxu0 0.0
        %514 = vmatprep.subr.mxu0 0.0
        %515 = vmatpush2.msra.mxu0 0.0
        %516 = vmatprep.subr.mxu0 0.0
        %517 = vmatpush2.msra.mxu0 0.0
        %518 = vmatprep.mubr.f32.mxu0 0.0
        %519 = vmatmul.mubr.f32.gmra.mxu0 %v445
        %v520 = vpop.f32.mrf.mxu0
        %v521 = vadd.f32 0.0, %v520
        %v522 = vpop.f32.mrf.mxu0
        %v523 = vadd.f32 0.0, %v522
        %524 = vdwg.mxu0
        %v525 = vld [vmem:[%s4] sm:$0xff]
        %527 = vset.pattern.permute.xlu0 0
        %528 = vperm.xlu0 %527, %v525
        %v529 = vpop.permute.xlu0 %528
        %v531 = vmul.f32 %v521, %v529
        %v532 = vmul.f32 %v523, %v529
        %v533 = vld [vmem:[%s5] sm:$0xff]
        %535 = vset.pattern.permute.xlu0 0
        %536 = vperm.xlu0 %535, %v533
        %v537 = vpop.permute.xlu0 %536
        %v539 = vadd.f32 %v531, %v537
        %v540 = vadd.f32 %v532, %v537
        %v541 = vmax.f32 %v539, 0.0
        %v542 = vmax.f32 %v540, 0.0
        %p543 = scmp.gt.s32.totalorder %s31, 0
        %s544 = scalar_select %p543, 1, 0
        %v545 = vstv %s544
        %vm546 = vcmp.eq.s32.totalorder %v545, 1
        %v547 = vsel %vm546, %v541, 0.0
        %p548 = scmp.lt.s32.totalorder %s31, 1
        %s549 = scalar_select %p548, 1, 0
        %v550 = vstv %s549
        %vm551 = vcmp.eq.s32.totalorder %v550, 1
        %v552 = vsel %vm551, %v542, 0.0
        %554 = vrot.lane.b32.xlu0 %v547, 1
        %v555 = vpop.permute.xlu0 %554
        %559 = vrot.lane.b32.xlu0 %v541, 1
        %v560 = vpop.permute.xlu0 %559
        %561 = vrot.lane.b32.xlu0 %v542, 1
        %v562 = vpop.permute.xlu0 %561
        %vm563 = vcmask 7168
        %v564 = vsel %vm563, %v560, %v562
        %568 = vrot.lane.b32.xlu0 %v552, 1
        %v569 = vpop.permute.xlu0 %568
        %v571 = vsel %vm563, 0.0, %v555
        %vm572 = vcmask 138240
        %v573 = vsel %vm572, %v571, %v560
        %v574 = vsel %vm572, %v564, %v569
        %vm575 = vcmask 269312
        %v576 = vsel %vm575, %v574, 0.0
        %v577 = vlaneseq
        %v578 = vand.u32 %v577, 127
        %vm579 = vcmp.lt.s32.totalorder %v578, 0
        %v580 = vsub.s32 0, %v578
        %v581 = vsel %vm579, %v580, %v578
        %v582 = vshrl.u32 %v581, 4
        %v583 = vand.u32 %v581, 15
        %v584 = vsub.s32 0, %v583
        %v585 = vsel %vm579, %v584, %v583
        %vm586 = vcmp.ne.s32.totalorder %v585, 0
        %vm587 = vcmp.lt.s32.totalorder %v585, 0
        %vm588 = vmand %vm587, %vm586
        %v589 = vadd.s32 %v585, 16
        %v590 = vsel %vm588, %v589, %v585
        %vm591 = vcmp.ne.s32.totalorder %v590, 0
        %v592 = vsel %vm591, 1, 0
        %vm593 = vcmp.eq.s32.totalorder %v592, 1
        %v594 = vsel %vm593, %v573, 0.0
        %vm595 = vcmp.ne.s32.totalorder %v590, 15
        %v596 = vsel %vm595, 1, 0
        %vm597 = vcmp.eq.s32.totalorder %v596, 1
        %600 = vrot.lane.b32.xlu0 %v573, 126
        %v601 = vpop.permute.xlu0 %600
        %602 = vrot.lane.b32.xlu0 %v576, 126
        %v603 = vpop.permute.xlu0 %602
        %vm604 = vcmask 1031168
        %v605 = vsel %vm604, %v601, %v603
        %v607 = vsel %vm597, %v605, 0.0
        %608 = vrot.lane.b32.xlu0 %v573, 112
        %v609 = vpop.permute.xlu0 %608
        %610 = vrot.lane.b32.xlu0 %v576, 112
        %v611 = vpop.permute.xlu0 %610
        %vm612 = vcmask 916480
        %v613 = vsel %vm612, %v609, %v611
        %v615 = vsel %vm593, %v613, 0.0
        %616 = vrot.lane.b32.xlu0 %v573, 110
        %v617 = vpop.permute.xlu0 %616
        %618 = vrot.lane.b32.xlu0 %v576, 110
        %v619 = vpop.permute.xlu0 %618
        %vm620 = vcmask 900096
        %v621 = vsel %vm620, %v617, %v619
        %v623 = vsel %vm597, %v621, 0.0
        %624 = vrot.lane.b32.xlu0 %v573, 96
        %v625 = vpop.permute.xlu0 %624
        %626 = vrot.lane.b32.xlu0 %v576, 96
        %v627 = vpop.permute.xlu0 %626
        %vm628 = vcmask 785408
        %v629 = vsel %vm628, %v625, %v627
        %v631 = vsel %vm593, %v629, 0.0
        %632 = vrot.lane.b32.xlu0 %v573, 94
        %v633 = vpop.permute.xlu0 %632
        %634 = vrot.lane.b32.xlu0 %v576, 94
        %v635 = vpop.permute.xlu0 %634
        %vm636 = vcmask 769024
        %v637 = vsel %vm636, %v633, %v635
        %v639 = vsel %vm597, %v637, 0.0
        %640 = vrot.lane.b32.xlu0 %v573, 127
        %v641 = vpop.permute.xlu0 %640
        %642 = vrot.lane.b32.xlu0 %v576, 127
        %v643 = vpop.permute.xlu0 %642
        %vm644 = vcmask 1039360
        %v645 = vsel %vm644, %v641, %v643
        %647 = vrot.lane.b32.xlu0 %v573, 111
        %v648 = vpop.permute.xlu0 %647
        %649 = vrot.lane.b32.xlu0 %v576, 111
        %v650 = vpop.permute.xlu0 %649
        %vm651 = vcmask 908288
        %v652 = vsel %vm651, %v648, %v650
        %654 = vrot.lane.b32.xlu0 %v573, 95
        %v655 = vpop.permute.xlu0 %654
        %656 = vrot.lane.b32.xlu0 %v576, 95
        %v657 = vpop.permute.xlu0 %656
        %vm658 = vcmask 777216
        %v659 = vsel %vm658, %v655, %v657
        %v661 = vld [vmem:[%s6] sm:$0xf]
        %vm662 = vcmask 588800
        %v664 = vsel %vm662, %v661, 0
        %666 = vmatprep.subr.mxu0 0.0
        %667 = vmatpush1.msra.mxu0 0.0
        %668 = vmatprep.subr.mxu0 0.0
        %669 = vmatpush1.msra.mxu0 0.0
        %670 = vmatprep.subr.mxu0 0.0
        %671 = vmatpush1.msra.mxu0 0.0
        %672 = vmatprep.subr.mxu0 0.0
        %673 = vmatpush1.msra.mxu0 0.0
        %674 = vmatprep.subr.mxu0 0.0
        %675 = vmatpush1.msra.mxu0 0.0
        %676 = vmatprep.subr.mxu0 0.0
        %677 = vmatpush1.msra.mxu0 0.0
        %678 = vmatprep.subr.mxu0 0.0
        %679 = vmatpush1.msra.mxu0 0.0
        %680 = vmatprep.subr.mxu0 0.0
        %681 = vmatpush1.msra.mxu0 %v639
        %682 = vmatprep.subr.mxu0 0.0
        %683 = vmatpush1.msra.mxu0 %v659
        %684 = vmatprep.subr.mxu0 0.0
        %685 = vmatpush1.msra.mxu0 %v631
        %686 = vmatprep.subr.mxu0 0.0
        %687 = vmatpush1.msra.mxu0 %v623
        %688 = vmatprep.subr.mxu0 0.0
        %689 = vmatpush1.msra.mxu0 %v652
        %690 = vmatprep.subr.mxu0 0.0
        %691 = vmatpush1.msra.mxu0 %v615
        %692 = vmatprep.subr.mxu0 0.0
        %693 = vmatpush1.msra.mxu0 %v607
        %694 = vmatprep.subr.mxu0 0.0
        %695 = vmatpush1.msra.mxu0 %v645
        %696 = vmatprep.subr.mxu0 0.0
        %697 = vmatpush1.msra.mxu0 %v594
        %698 = vmatprep.subr.mxu0 0.0
        %699 = vmatpush2.msra.mxu0 0.0
        %700 = vmatprep.subr.mxu0 0.0
        %701 = vmatpush2.msra.mxu0 0.0
        %702 = vmatprep.subr.mxu0 0.0
        %703 = vmatpush2.msra.mxu0 0.0
        %704 = vmatprep.subr.mxu0 0.0
        %705 = vmatpush2.msra.mxu0 0.0
        %706 = vmatprep.subr.mxu0 0.0
        %707 = vmatpush2.msra.mxu0 0.0
        %708 = vmatprep.subr.mxu0 0.0
        %709 = vmatpush2.msra.mxu0 0.0
        %710 = vmatprep.subr.mxu0 0.0
        %711 = vmatpush2.msra.mxu0 0.0
        %712 = vmatprep.subr.mxu0 0.0
        %713 = vmatpush2.msra.mxu0 0.0
        %714 = vmatprep.subr.mxu0 0.0
        %715 = vmatpush2.msra.mxu0 0.0
        %716 = vmatprep.subr.mxu0 0.0
        %717 = vmatpush2.msra.mxu0 0.0
        %718 = vmatprep.subr.mxu0 0.0
        %719 = vmatpush2.msra.mxu0 0.0
        %720 = vmatprep.subr.mxu0 0.0
        %721 = vmatpush2.msra.mxu0 0.0
        %722 = vmatprep.subr.mxu0 0.0
        %723 = vmatpush2.msra.mxu0 0.0
        %724 = vmatprep.subr.mxu0 0.0
        %725 = vmatpush2.msra.mxu0 0.0
        %726 = vmatprep.subr.mxu0 0.0
        %727 = vmatpush2.msra.mxu0 0.0
        %728 = vmatprep.subr.mxu0 0.0
        %729 = vmatpush2.msra.mxu0 0.0
        %730 = vmatprep.mubr.f32.mxu0 0.0
        %731 = vmatmul.mubr.f32.gmra.mxu0 %v664
        %v732 = vpop.f32.mrf.mxu0
        %v733 = vadd.f32 0.0, %v732
        %v734 = vpop.f32.mrf.mxu0
        %735 = vdwg.mxu0
        %v736 = vld [vmem:[%s7] sm:$0xf]
        %738 = vset.pattern.permute.xlu0 0
        %739 = vperm.xlu0 %738, %v736
        %v740 = vpop.permute.xlu0 %739
        %v742 = vmul.f32 %v733, %v740
        %v743 = vld [vmem:[%s8] sm:$0xf]
        %745 = vset.pattern.permute.xlu0 0
        %746 = vperm.xlu0 %745, %v743
        %v747 = vpop.permute.xlu0 %746
        %v749 = vadd.f32 %v742, %v747
        %v750 = vmax.f32 %v749, 0.0
        %v751 = vadd.f32 %v750, %v428
        %752 = vst [vmem:[%s411] sm:$0xf] %v751
        %s753 = sand.u32 %s258, 1
        %s754 = scalar_lea.sflag [#allocation4], %s753
        %s755 = sand.u32 %s258, 1
        %s756 = smul.addr %s755, 4
        %s757 = scalar_lea.vmem [#allocation5], %s756
        // Predicated region
        $region61: #{tpu_custom_call.1} parent=55 // pred_check
          %p758 = pneg %p268
        $region62: #{tpu_custom_call.1} parent=55 // pred_check_branch
          %760 = sbr.rel (%p758) target = $region64
        $region63: #{tpu_custom_call.1} parent=55 // pred_region
          %s762 = ssub.s32 64, 64
          %763 = vsyncadd %s754, %s762
          %s764 = smul.addr %s30, 2
          %s765 = sadd.s32 %s31, %s764
          %s766 = smul.addr %s765, 64
          %s767 = scalar_lea.hbm %s9, %s766
          %s769 = sshll.u32 %s757, 4
          %s770 = int_to_ptr.vmem [resolvable:$true] %s769
          %772 = dma.vmem_to_hbm [thread:$0]  %s770, 64, %s767, %s754
        $region64: #{tpu_custom_call.1} parent=55 // pred_fallthru
          _
      $region56: #{tpu_custom_call.1} parent=5 // pred_fallthru
        _
      %p773 = scmp.le.s32.totalorder 2, %s21
      // Predicated region
      $region65: #{tpu_custom_call.1} parent=5 // pred_check
        %p774 = pneg %p773
      $region66: #{tpu_custom_call.1} parent=5 // pred_check_branch
        %776 = sbr.rel (%p774) target = $region68
      $region67: #{tpu_custom_call.1} parent=5 // pred_region
        %s777 = ssub.s32 %s21, 2
        // Predicated region
        $region69: #{tpu_custom_call.1} parent=67 // pred_check
          %p778 = pneg %p274
        $region70: #{tpu_custom_call.1} parent=67 // pred_check_branch
          %780 = sbr.rel (%p778) target = $region72
        $region71: #{tpu_custom_call.1} parent=67 // pred_region
          %s781 = sand.u32 %s259, 1
          %s782 = scalar_lea.sflag [#allocation4], %s781
          %s783 = sand.u32 %s259, 1
          %s784 = smul.addr %s783, 4
          %s785 = scalar_lea.vmem [#allocation5], %s784
          %786 = dma.done %s782, 64
        $region72: #{tpu_custom_call.1} parent=67 // pred_fallthru
          _
      $region68: #{tpu_custom_call.1} parent=5 // pred_fallthru
        _
    $region6: #{tpu_custom_call.1} parent=1 // loop_footer
      %s25 = sadd.s32 1, %s21
    $region7: #{tpu_custom_call.1} parent=1 // loop_footer_branch
      %20 = sbr.rel target = $region3
    $region8: #{tpu_custom_call.1} parent=1 // loop_exit
      _
    %787 = vsyncpa [#allocation3], 1
    %s788 = scalar_lea.sflag [#allocation3], 1
    %789 = vsyncpa %s788, 1
    %790 = vsyncpa [#allocation4], 1
    %s791 = scalar_lea.sflag [#allocation4], 1
    %792 = vsyncpa %s791, 1

</llo_original>
